<compile_context>
chip_gen: v7x
topology: tpu7x:2x2x1
jax: 0.10.0
libtpu: 0.0.40
codegen_flags: <defaults>
</compile_context>

<pallas_src>
import functools

import jax
import jax.numpy as jnp
from jax import lax
from jax.experimental import pallas as pl
from jax.experimental.pallas import tpu as pltpu

EPS = 1e-8


def _round_up(x, m):
    return ((x + m - 1) // m) * m


def _pair_tile_kernel(feat_r_ref, feat_ct_ref, sq_r_ref, sq_c_ref,
                      lab_r_ref, lab_c_ref, sums_ref, cnts_ref,
                      acc_f, acc_i, *, block, b_valid, needs_pad_mask):
    # feat_r_ref : (T, Dp)  row feature tile (native dtype)
    # feat_ct_ref: (Dp, T)  column feature tile, pre-transposed in the wrapper
    # sq_r_ref   : (T, 1)   row squared norms (f32)
    # sq_c_ref   : (1, T)   column squared norms (f32)
    # lab_r_ref  : (T, 1)   row labels (int32)
    # lab_c_ref  : (1, T)   column labels (int32)
    # sums_ref   : (1, 8, 128) f32 per-row-block partial sums output
    # cnts_ref   : (1, 8, 128) i32 per-row-block positive-pair count output
    # acc_f      : SMEM (2,) f32  [pos_sum, offdiag_sum]
    # acc_i      : SMEM (1,) i32  [pos_count]
    i = pl.program_id(0)
    j = pl.program_id(1)
    nj = pl.num_programs(1)

    @pl.when(j == 0)
    def _init():
        acc_f[0] = 0.0
        acc_f[1] = 0.0
        acc_i[0] = 0

    # (T,T) distance tile: ||a||^2 + ||b||^2 - 2 a.b, MXU matmul, f32 accum.
    gram = jnp.dot(feat_r_ref[...], feat_ct_ref[...],
                   preferred_element_type=jnp.float32)            # (T, T)
    d2 = sq_r_ref[...] + sq_c_ref[...] - 2.0 * gram
    dist = jnp.sqrt(jnp.maximum(d2, 0.0))                         # (T, T) f32

    pos = lab_r_ref[...] == lab_c_ref[...]                        # (T, T) bool

    if needs_pad_mask:
        ri = lax.broadcasted_iota(jnp.int32, (block, block), 0) + i * block
        cj = lax.broadcasted_iota(jnp.int32, (block, block), 1) + j * block
        valid = jnp.logical_and(ri < b_valid, cj < b_valid)

    def _accumulate(pos_mask, offdiag_mask):
        tile_pos = jnp.sum(jnp.where(pos_mask, dist, 0.0))
        if offdiag_mask is None:
            tile_off = jnp.sum(dist)
        else:
            tile_off = jnp.sum(jnp.where(offdiag_mask, dist, 0.0))
        # per-tile count <= T*T <= 65536, exact in f32; accumulated as int32.
        tile_cnt = jnp.sum(jnp.where(pos_mask, 1.0, 0.0))
        acc_f[0] += tile_pos
        acc_f[1] += tile_off
        acc_i[0] += tile_cnt.astype(jnp.int32)

    is_diag = i == j

    @pl.when(is_diag)
    def _diag_tile():
        if needs_pad_mask:
            off = jnp.logical_and(ri != cj, valid)
        else:
            rl = lax.broadcasted_iota(jnp.int32, (block, block), 0)
            cl = lax.broadcasted_iota(jnp.int32, (block, block), 1)
            off = rl != cl
        _accumulate(jnp.logical_and(pos, off), off)

    @pl.when(i != j)
    def _offdiag_tile():
        if needs_pad_mask:
            _accumulate(jnp.logical_and(pos, valid), valid)
        else:
            _accumulate(pos, None)

    @pl.when(j == nj - 1)
    def _finalize():
        sub = lax.broadcasted_iota(jnp.int32, (1, 8, 128), 1)
        lane = lax.broadcasted_iota(jnp.int32, (1, 8, 128), 2)
        slot0 = jnp.logical_and(sub == 0, lane == 0)
        slot1 = jnp.logical_and(sub == 1, lane == 0)
        sums_ref[...] = (jnp.where(slot0, acc_f[0], 0.0)
                         + jnp.where(slot1, acc_f[1], 0.0))
        cnts_ref[...] = jnp.where(slot0, acc_i[0], 0)


@functools.partial(jax.jit, static_argnames=("margin_ratio", "block_b"))
def improved_contrastive_loss(features, labels, margin_ratio=2.0, block_b=None):
    """features: (B, D) float32/bfloat16; labels: (B,) int. Returns scalar f32 loss."""
    B, D = features.shape

    # --- tile selection -------------------------------------------------------
    if block_b is None:
        block_b = B if B <= 512 else 256        # single block for small B, MXU-friendly otherwise
    T = int(block_b)
    B_pad = _round_up(B, T)
    num_blocks = B_pad // T
    if num_blocks > 1 and T % 128 != 0:
        raise ValueError("block_b must be a multiple of 128 when the batch is tiled")
    D_pad = _round_up(D, 128)                   # zero columns change neither gram nor norms
    needs_pad_mask = B_pad != B

    # --- wrapper-side layout plumbing (cheap XLA ops, computed once) ----------
    feat = jnp.pad(features, ((0, B_pad - B), (0, D_pad - D)))
    feat_t = feat.T                             # (Dp, B_pad): no in-kernel transpose ever
    xf = feat.astype(jnp.float32)
    sq = jnp.sum(xf * xf, axis=-1)              # (B_pad,) f32
    sq_row = sq.reshape(B_pad, 1)
    sq_col = sq.reshape(1, B_pad)

    lab = labels.astype(jnp.int32).reshape(B)
    lab_row = jnp.pad(lab, (0, B_pad - B), constant_values=-1).reshape(B_pad, 1)
    lab_col = jnp.pad(lab, (0, B_pad - B), constant_values=-2).reshape(1, B_pad)

    # --- per-generation VMEM limit with headroom -------------------------------
    itemsize = jnp.dtype(features.dtype).itemsize
    est = (4 * T * D_pad * itemsize             # double-buffered row + col feature tiles
           + 8 * T * 4                          # sq / label tiles
           + 8 * T * T * 4                      # gram/d2/dist/mask temporaries
           + (4 << 20))                         # headroom for Mosaic internal scratch
    try:
        phys = pltpu.get_tpu_info().vmem_capacity_bytes
    except Exception:
        phys = 64 * 1024 * 1024                 # conservative fallback (v7x per-TC)
    vmem_limit = int(min(phys * 3 // 4, max(est, 16 * 1024 * 1024)))

    kernel = functools.partial(_pair_tile_kernel, block=T, b_valid=B,
                               needs_pad_mask=needs_pad_mask)

    sums, cnts = pl.pallas_call(
        kernel,
        out_shape=(jax.ShapeDtypeStruct((num_blocks, 8, 128), jnp.float32),
                   jax.ShapeDtypeStruct((num_blocks, 8, 128), jnp.int32)),
        grid_spec=pltpu.PrefetchScalarGridSpec(
            num_scalar_prefetch=0,
            grid=(num_blocks, num_blocks),
            in_specs=[
                pl.BlockSpec((T, D_pad), lambda i, j: (i, 0)),   # row features
                pl.BlockSpec((D_pad, T), lambda i, j: (0, j)),   # col features (pre-transposed)
                pl.BlockSpec((T, 1), lambda i, j: (i, 0)),       # row squared norms
                pl.BlockSpec((1, T), lambda i, j: (0, j)),       # col squared norms
                pl.BlockSpec((T, 1), lambda i, j: (i, 0)),       # row labels
                pl.BlockSpec((1, T), lambda i, j: (0, j)),       # col labels
            ],
            out_specs=[
                pl.BlockSpec((1, 8, 128), lambda i, j: (i, 0, 0)),
                pl.BlockSpec((1, 8, 128), lambda i, j: (i, 0, 0)),
            ],
            scratch_shapes=[
                pltpu.SMEM((2,), jnp.float32),   # [pos_sum, offdiag_sum]
                pltpu.SMEM((1,), jnp.int32),     # [pos_count]
            ]),
        compiler_params=pltpu.CompilerParams(
            dimension_semantics=("parallel", "arbitrary"),
            vmem_limit_bytes=vmem_limit),
    )(feat, feat_t, sq_row, sq_col, lab_row, lab_col)

    # --- tiny final reduction + loss formula in plain XLA ----------------------
    pos_sum = jnp.sum(sums[:, 0, 0])
    off_sum = jnp.sum(sums[:, 1, 0])
    pos_count_i = jnp.sum(cnts[:, 0, 0])                  # int32, exact
    neg_count_i = B * (B - 1) - pos_count_i

    pos_count = pos_count_i.astype(jnp.float32)
    neg_count = neg_count_i.astype(jnp.float32)
    neg_sum = off_sum - pos_sum

    avg_pos = pos_sum / jnp.maximum(pos_count, 1.0)
    avg_neg = neg_sum / jnp.maximum(neg_count, 1.0)
    target_neg = margin_ratio * avg_pos
    pos_loss = avg_pos / (avg_pos + EPS)
    neg_loss = jnp.maximum(target_neg - avg_neg, 0.0) / (target_neg + EPS)
    loss = pos_loss + neg_loss
    return jnp.where((pos_count_i == 0) | (neg_count_i == 0), 0.0, loss)


def _reference_loss(features, labels, margin_ratio=2.0):
    """Plain-JAX reference mirroring the PyTorch forward."""
    x = features.astype(jnp.float32)
    diff = x[:, None, :] - x[None, :, :]
    d = jnp.sqrt(jnp.maximum(jnp.sum(diff * diff, axis=-1), 0.0))
    lab = labels.reshape(-1, 1)
    eq = (lab == lab.T).astype(jnp.float32)
    no_diag = 1.0 - jnp.eye(x.shape[0], dtype=jnp.float32)
    mp = eq * no_diag
    mn = (1.0 - eq) * no_diag
    avg_pos = jnp.sum(d * mp) / jnp.maximum(jnp.sum(mp), 1.0)
    avg_neg = jnp.sum(d * mn) / jnp.maximum(jnp.sum(mn), 1.0)
    target_neg = margin_ratio * avg_pos
    pos_loss = avg_pos / (avg_pos + EPS)
    neg_loss = jnp.maximum(target_neg - avg_neg, 0.0) / (target_neg + EPS)
    loss = pos_loss + neg_loss
    return jnp.where((jnp.sum(mp) == 0) | (jnp.sum(mn) == 0), 0.0, loss)


if __name__ == "__main__":
    key = jax.random.PRNGKey(0)
    k1, k2 = jax.random.split(key)

    # Case 1: tiny single-block path (B=8, D=32).
    f1 = jax.random.normal(k1, (8, 32), dtype=jnp.float32)
    l1 = jnp.array([0, 1, 0, 1, 1, 0, 0, 1], dtype=jnp.int32)
    out1 = jax.block_until_ready(improved_contrastive_loss(f1, l1))
    ref1 = jax.block_until_ready(_reference_loss(f1, l1))
    assert jnp.allclose(out1, ref1, atol=1e-3, rtol=1e-3), (out1, ref1)

    # Case 2: tiled 2x2 grid with padding in B and D (B=200, D=48, T=128):
    # exercises diagonal + off-diagonal tiles, validity masking and the
    # 'parallel' row axis.
    f2 = jax.random.normal(k2, (200, 48), dtype=jnp.float32)
    l2 = (jnp.arange(200, dtype=jnp.int32) % 4)
    out2 = jax.block_until_ready(improved_contrastive_loss(f2, l2, block_b=128))
    ref2 = jax.block_until_ready(_reference_loss(f2, l2))
    assert jnp.allclose(out2, ref2, atol=1e-3, rtol=1e-3), (out2, ref2)

    print("KERNEL_OK")
</pallas_src>

<mosaic_0001>
module attributes {stable_mosaic.version = 11 : i64} {
  func.func @_pair_tile_kernel(%arg0: i32, %arg1: i32, %arg2: memref<8x128xf32, #tpu.memory_space<vmem>>, %arg3: memref<128x8xf32, #tpu.memory_space<vmem>>, %arg4: memref<8x1xf32, #tpu.memory_space<vmem>>, %arg5: memref<1x8xf32, #tpu.memory_space<vmem>>, %arg6: memref<8x1xi32, #tpu.memory_space<vmem>>, %arg7: memref<1x8xi32, #tpu.memory_space<vmem>>, %arg8: memref<1x8x128xf32, #tpu.memory_space<vmem>>, %arg9: memref<1x8x128xi32, #tpu.memory_space<vmem>>, %arg10: memref<2xf32, #tpu.memory_space<smem>>, %arg11: memref<1xi32, #tpu.memory_space<smem>>) attributes {dimension_semantics = [#tpu.dimension_semantics<parallel>, #tpu.dimension_semantics<arbitrary>], iteration_bounds = array<i64: 1, 1>, scalar_prefetch = 0 : i64, scratch_operands = 2 : i64, tpu.core_type = #tpu.core_type<tc>, window_params = [{transform_indices = @transform_0, window_bounds = array<i64: 8, 128>}, {transform_indices = @transform_1, window_bounds = array<i64: 128, 8>}, {transform_indices = @transform_2, window_bounds = array<i64: 8, 1>}, {transform_indices = @transform_3, window_bounds = array<i64: 1, 8>}, {transform_indices = @transform_4, window_bounds = array<i64: 8, 1>}, {transform_indices = @transform_5, window_bounds = array<i64: 1, 8>}, {transform_indices = @transform_6, window_bounds = array<i64: 1, 8, 128>}, {transform_indices = @transform_7, window_bounds = array<i64: 1, 8, 128>}]} {
    %c0_i32 = arith.constant 0 : i32
    %0 = arith.cmpi eq, %arg1, %c0_i32 : i32
    %1 = arith.extui %0 : i1 to i32
    %c0_i32_0 = arith.constant 0 : i32
    %2 = arith.cmpi ne, %1, %c0_i32_0 : i32
    scf.if %2 {
      %cst_18 = arith.constant 0.000000e+00 : f32
      %c0_19 = arith.constant 0 : index
      %31 = memref.load %arg10[%c0_19] : memref<2xf32, #tpu.memory_space<smem>>
      memref.store %cst_18, %arg10[%c0_19] : memref<2xf32, #tpu.memory_space<smem>>
      %cst_20 = arith.constant 0.000000e+00 : f32
      %c1 = arith.constant 1 : index
      %32 = memref.load %arg10[%c1] : memref<2xf32, #tpu.memory_space<smem>>
      memref.store %cst_20, %arg10[%c1] : memref<2xf32, #tpu.memory_space<smem>>
      %c0_i32_21 = arith.constant 0 : i32
      %c0_22 = arith.constant 0 : index
      %33 = memref.load %arg11[%c0_22] : memref<1xi32, #tpu.memory_space<smem>>
      memref.store %c0_i32_21, %arg11[%c0_22] : memref<1xi32, #tpu.memory_space<smem>>
    } else {
    }
    %c0 = arith.constant 0 : index
    %c0_1 = arith.constant 0 : index
    %3 = vector.load %arg2[%c0, %c0_1] : memref<8x128xf32, #tpu.memory_space<vmem>>, vector<8x128xf32>
    %c0_2 = arith.constant 0 : index
    %c0_3 = arith.constant 0 : index
    %4 = vector.load %arg3[%c0_2, %c0_3] : memref<128x8xf32, #tpu.memory_space<vmem>>, vector<128x8xf32>
    %cst = arith.constant dense<0.000000e+00> : vector<8x8xf32>
    %5 = tpu.matmul %3, %4, %cst {dimension_numbers = #tpu.dot_dimension_numbers<[1], [0], [0], [1], [0, 0, 1, 1], [], []>} : vector<8x128xf32>, vector<128x8xf32>, vector<8x8xf32> -> vector<8x8xf32>
    %c0_4 = arith.constant 0 : index
    %c0_5 = arith.constant 0 : index
    %6 = vector.load %arg4[%c0_4, %c0_5] : memref<8x1xf32, #tpu.memory_space<vmem>>, vector<8x1xf32>
    %c0_6 = arith.constant 0 : index
    %c0_7 = arith.constant 0 : index
    %7 = vector.load %arg5[%c0_6, %c0_7] : memref<1x8xf32, #tpu.memory_space<vmem>>, vector<1x8xf32>
    %8 = vector.broadcast %6 : vector<8x1xf32> to vector<8x8xf32>
    %9 = vector.broadcast %7 : vector<1x8xf32> to vector<8x8xf32>
    %10 = arith.addf %8, %9 : vector<8x8xf32>
    %cst_8 = arith.constant 2.000000e+00 : f32
    %11 = vector.broadcast %cst_8 : f32 to vector<8x8xf32>
    %12 = arith.mulf %11, %5 : vector<8x8xf32>
    %13 = arith.subf %10, %12 : vector<8x8xf32>
    %cst_9 = arith.constant 0.000000e+00 : f32
    %14 = vector.broadcast %cst_9 : f32 to vector<8x8xf32>
    %15 = arith.maximumf %13, %14 : vector<8x8xf32>
    %16 = math.sqrt %15 : vector<8x8xf32>
    %c0_10 = arith.constant 0 : index
    %c0_11 = arith.constant 0 : index
    %17 = vector.load %arg6[%c0_10, %c0_11] : memref<8x1xi32, #tpu.memory_space<vmem>>, vector<8x1xi32>
    %c0_12 = arith.constant 0 : index
    %c0_13 = arith.constant 0 : index
    %18 = vector.load %arg7[%c0_12, %c0_13] : memref<1x8xi32, #tpu.memory_space<vmem>>, vector<1x8xi32>
    %19 = vector.broadcast %17 : vector<8x1xi32> to vector<8x8xi32>
    %20 = vector.broadcast %18 : vector<1x8xi32> to vector<8x8xi32>
    %21 = arith.cmpi eq, %19, %20 : vector<8x8xi32>
    %22 = arith.cmpi eq, %arg0, %arg1 : i32
    %23 = arith.extui %22 : i1 to i32
    %c0_i32_14 = arith.constant 0 : i32
    %24 = arith.cmpi ne, %23, %c0_i32_14 : i32
    scf.if %24 {
      %31 = tpu.iota {dimensions = array<i32: 0>} : vector<8x8xi32>
      %32 = tpu.iota {dimensions = array<i32: 1>} : vector<8x8xi32>
      %33 = arith.cmpi ne, %31, %32 : vector<8x8xi32>
      %34 = arith.andi %21, %33 : vector<8x8xi1>
      %cst_18 = arith.constant 0.000000e+00 : f32
      %35 = vector.broadcast %cst_18 : f32 to vector<8x8xf32>
      %36 = arith.select %34, %16, %35 : vector<8x8xi1>, vector<8x8xf32>
      %37 = vector.shape_cast %36 : vector<8x8xf32> to vector<1x8x8xf32>
      %cst_19 = arith.constant dense<0.000000e+00> : vector<1xf32>
      %38 = vector.multi_reduction <add>, %37, %cst_19 [1, 2] : vector<1x8x8xf32> to vector<1xf32>
      %39 = vector.shape_cast %38 : vector<1xf32> to vector<1x1x1xf32>
      %40 = vector.extract %39[0, 0, 0] : f32 from vector<1x1x1xf32>
      %cst_20 = arith.constant 0.000000e+00 : f32
      %41 = vector.broadcast %cst_20 : f32 to vector<8x8xf32>
      %42 = arith.select %33, %16, %41 : vector<8x8xi1>, vector<8x8xf32>
      %43 = vector.shape_cast %42 : vector<8x8xf32> to vector<1x8x8xf32>
      %cst_21 = arith.constant dense<0.000000e+00> : vector<1xf32>
      %44 = vector.multi_reduction <add>, %43, %cst_21 [1, 2] : vector<1x8x8xf32> to vector<1xf32>
      %45 = vector.shape_cast %44 : vector<1xf32> to vector<1x1x1xf32>
      %46 = vector.extract %45[0, 0, 0] : f32 from vector<1x1x1xf32>
      %cst_22 = arith.constant 1.000000e+00 : f32
      %cst_23 = arith.constant 0.000000e+00 : f32
      %47 = vector.broadcast %cst_22 : f32 to vector<8x8xf32>
      %48 = vector.broadcast %cst_23 : f32 to vector<8x8xf32>
      %49 = arith.select %34, %47, %48 : vector<8x8xi1>, vector<8x8xf32>
      %50 = vector.shape_cast %49 : vector<8x8xf32> to vector<1x8x8xf32>
      %cst_24 = arith.constant dense<0.000000e+00> : vector<1xf32>
      %51 = vector.multi_reduction <add>, %50, %cst_24 [1, 2] : vector<1x8x8xf32> to vector<1xf32>
      %52 = vector.shape_cast %51 : vector<1xf32> to vector<1x1x1xf32>
      %53 = vector.extract %52[0, 0, 0] : f32 from vector<1x1x1xf32>
      %c0_25 = arith.constant 0 : index
      %54 = memref.load %arg10[%c0_25] : memref<2xf32, #tpu.memory_space<smem>>
      %55 = arith.addf %54, %40 : f32
      %c0_26 = arith.constant 0 : index
      %56 = memref.load %arg10[%c0_26] : memref<2xf32, #tpu.memory_space<smem>>
      memref.store %55, %arg10[%c0_26] : memref<2xf32, #tpu.memory_space<smem>>
      %c1 = arith.constant 1 : index
      %57 = memref.load %arg10[%c1] : memref<2xf32, #tpu.memory_space<smem>>
      %58 = arith.addf %57, %46 : f32
      %c1_27 = arith.constant 1 : index
      %59 = memref.load %arg10[%c1_27] : memref<2xf32, #tpu.memory_space<smem>>
      memref.store %58, %arg10[%c1_27] : memref<2xf32, #tpu.memory_space<smem>>
      %c0_28 = arith.constant 0 : index
      %60 = memref.load %arg11[%c0_28] : memref<1xi32, #tpu.memory_space<smem>>
      %61 = arith.fptosi %53 : f32 to i32
      %62 = arith.addi %60, %61 : i32
      %c0_29 = arith.constant 0 : index
      %63 = memref.load %arg11[%c0_29] : memref<1xi32, #tpu.memory_space<smem>>
      memref.store %62, %arg11[%c0_29] : memref<1xi32, #tpu.memory_space<smem>>
    } else {
    }
    %25 = arith.cmpi ne, %arg0, %arg1 : i32
    %26 = arith.extui %25 : i1 to i32
    %c0_i32_15 = arith.constant 0 : i32
    %27 = arith.cmpi ne, %26, %c0_i32_15 : i32
    scf.if %27 {
      %cst_18 = arith.constant 0.000000e+00 : f32
      %31 = vector.broadcast %cst_18 : f32 to vector<8x8xf32>
      %32 = arith.select %21, %16, %31 : vector<8x8xi1>, vector<8x8xf32>
      %33 = vector.shape_cast %32 : vector<8x8xf32> to vector<1x8x8xf32>
      %cst_19 = arith.constant dense<0.000000e+00> : vector<1xf32>
      %34 = vector.multi_reduction <add>, %33, %cst_19 [1, 2] : vector<1x8x8xf32> to vector<1xf32>
      %35 = vector.shape_cast %34 : vector<1xf32> to vector<1x1x1xf32>
      %36 = vector.extract %35[0, 0, 0] : f32 from vector<1x1x1xf32>
      %37 = vector.shape_cast %16 : vector<8x8xf32> to vector<1x8x8xf32>
      %cst_20 = arith.constant dense<0.000000e+00> : vector<1xf32>
      %38 = vector.multi_reduction <add>, %37, %cst_20 [1, 2] : vector<1x8x8xf32> to vector<1xf32>
      %39 = vector.shape_cast %38 : vector<1xf32> to vector<1x1x1xf32>
      %40 = vector.extract %39[0, 0, 0] : f32 from vector<1x1x1xf32>
      %cst_21 = arith.constant 1.000000e+00 : f32
      %cst_22 = arith.constant 0.000000e+00 : f32
      %41 = vector.broadcast %cst_21 : f32 to vector<8x8xf32>
      %42 = vector.broadcast %cst_22 : f32 to vector<8x8xf32>
      %43 = arith.select %21, %41, %42 : vector<8x8xi1>, vector<8x8xf32>
      %44 = vector.shape_cast %43 : vector<8x8xf32> to vector<1x8x8xf32>
      %cst_23 = arith.constant dense<0.000000e+00> : vector<1xf32>
      %45 = vector.multi_reduction <add>, %44, %cst_23 [1, 2] : vector<1x8x8xf32> to vector<1xf32>
      %46 = vector.shape_cast %45 : vector<1xf32> to vector<1x1x1xf32>
      %47 = vector.extract %46[0, 0, 0] : f32 from vector<1x1x1xf32>
      %c0_24 = arith.constant 0 : index
      %48 = memref.load %arg10[%c0_24] : memref<2xf32, #tpu.memory_space<smem>>
      %49 = arith.addf %48, %36 : f32
      %c0_25 = arith.constant 0 : index
      %50 = memref.load %arg10[%c0_25] : memref<2xf32, #tpu.memory_space<smem>>
      memref.store %49, %arg10[%c0_25] : memref<2xf32, #tpu.memory_space<smem>>
      %c1 = arith.constant 1 : index
      %51 = memref.load %arg10[%c1] : memref<2xf32, #tpu.memory_space<smem>>
      %52 = arith.addf %51, %40 : f32
      %c1_26 = arith.constant 1 : index
      %53 = memref.load %arg10[%c1_26] : memref<2xf32, #tpu.memory_space<smem>>
      memref.store %52, %arg10[%c1_26] : memref<2xf32, #tpu.memory_space<smem>>
      %c0_27 = arith.constant 0 : index
      %54 = memref.load %arg11[%c0_27] : memref<1xi32, #tpu.memory_space<smem>>
      %55 = arith.fptosi %47 : f32 to i32
      %56 = arith.addi %54, %55 : i32
      %c0_28 = arith.constant 0 : index
      %57 = memref.load %arg11[%c0_28] : memref<1xi32, #tpu.memory_space<smem>>
      memref.store %56, %arg11[%c0_28] : memref<1xi32, #tpu.memory_space<smem>>
    } else {
    }
    %c0_i32_16 = arith.constant 0 : i32
    %28 = arith.cmpi eq, %arg1, %c0_i32_16 : i32
    %29 = arith.extui %28 : i1 to i32
    %c0_i32_17 = arith.constant 0 : i32
    %30 = arith.cmpi ne, %29, %c0_i32_17 : i32
    scf.if %30 {
      %31 = tpu.iota {dimensions = array<i32: 1>} : vector<1x8x128xi32>
      %32 = tpu.iota {dimensions = array<i32: 2>} : vector<1x8x128xi32>
      %c0_i32_18 = arith.constant 0 : i32
      %33 = vector.broadcast %c0_i32_18 : i32 to vector<1x8x128xi32>
      %34 = arith.cmpi eq, %31, %33 : vector<1x8x128xi32>
      %c0_i32_19 = arith.constant 0 : i32
      %35 = vector.broadcast %c0_i32_19 : i32 to vector<1x8x128xi32>
      %36 = arith.cmpi eq, %32, %35 : vector<1x8x128xi32>
      %37 = arith.andi %34, %36 : vector<1x8x128xi1>
      %c1_i32 = arith.constant 1 : i32
      %38 = vector.broadcast %c1_i32 : i32 to vector<1x8x128xi32>
      %39 = arith.cmpi eq, %31, %38 : vector<1x8x128xi32>
      %c0_i32_20 = arith.constant 0 : i32
      %40 = vector.broadcast %c0_i32_20 : i32 to vector<1x8x128xi32>
      %41 = arith.cmpi eq, %32, %40 : vector<1x8x128xi32>
      %42 = arith.andi %39, %41 : vector<1x8x128xi1>
      %c0_21 = arith.constant 0 : index
      %43 = memref.load %arg10[%c0_21] : memref<2xf32, #tpu.memory_space<smem>>
      %cst_22 = arith.constant 0.000000e+00 : f32
      %44 = vector.broadcast %43 : f32 to vector<1x8x128xf32>
      %45 = vector.broadcast %cst_22 : f32 to vector<1x8x128xf32>
      %46 = arith.select %37, %44, %45 : vector<1x8x128xi1>, vector<1x8x128xf32>
      %c1 = arith.constant 1 : index
      %47 = memref.load %arg10[%c1] : memref<2xf32, #tpu.memory_space<smem>>
      %cst_23 = arith.constant 0.000000e+00 : f32
      %48 = vector.broadcast %47 : f32 to vector<1x8x128xf32>
      %49 = vector.broadcast %cst_23 : f32 to vector<1x8x128xf32>
      %50 = arith.select %42, %48, %49 : vector<1x8x128xi1>, vector<1x8x128xf32>
      %51 = arith.addf %46, %50 : vector<1x8x128xf32>
      %c0_24 = arith.constant 0 : index
      %c0_25 = arith.constant 0 : index
      %c0_26 = arith.constant 0 : index
      %52 = vector.load %arg8[%c0_24, %c0_25, %c0_26] : memref<1x8x128xf32, #tpu.memory_space<vmem>>, vector<1x8x128xf32>
      tpu.vector_store %arg8[%c0_24, %c0_25, %c0_26], %51 {strides = array<i32>} : memref<1x8x128xf32, #tpu.memory_space<vmem>>, vector<1x8x128xf32>,
      %c0_27 = arith.constant 0 : index
      %53 = memref.load %arg11[%c0_27] : memref<1xi32, #tpu.memory_space<smem>>
      %c0_i32_28 = arith.constant 0 : i32
      %54 = vector.broadcast %53 : i32 to vector<1x8x128xi32>
      %55 = vector.broadcast %c0_i32_28 : i32 to vector<1x8x128xi32>
      %56 = arith.select %37, %54, %55 : vector<1x8x128xi1>, vector<1x8x128xi32>
      %c0_29 = arith.constant 0 : index
      %c0_30 = arith.constant 0 : index
      %c0_31 = arith.constant 0 : index
      %57 = vector.load %arg9[%c0_29, %c0_30, %c0_31] : memref<1x8x128xi32, #tpu.memory_space<vmem>>, vector<1x8x128xi32>
      tpu.vector_store %arg9[%c0_29, %c0_30, %c0_31], %56 {strides = array<i32>} : memref<1x8x128xi32, #tpu.memory_space<vmem>>, vector<1x8x128xi32>,
    } else {
    }
    return
  }
  func.func @transform_0(%arg0: i32, %arg1: i32) -> (i32, i32) {
    %c0_i32 = arith.constant 0 : i32
    %c0_i32_0 = arith.constant 0 : i32
    return %arg0, %c0_i32 : i32, i32
  }
  func.func @transform_1(%arg0: i32, %arg1: i32) -> (i32, i32) {
    %c0_i32 = arith.constant 0 : i32
    %c0_i32_0 = arith.constant 0 : i32
    return %c0_i32, %arg1 : i32, i32
  }
  func.func @transform_2(%arg0: i32, %arg1: i32) -> (i32, i32) {
    %c0_i32 = arith.constant 0 : i32
    %c0_i32_0 = arith.constant 0 : i32
    return %arg0, %c0_i32 : i32, i32
  }
  func.func @transform_3(%arg0: i32, %arg1: i32) -> (i32, i32) {
    %c0_i32 = arith.constant 0 : i32
    %c0_i32_0 = arith.constant 0 : i32
    return %c0_i32, %arg1 : i32, i32
  }
  func.func @transform_4(%arg0: i32, %arg1: i32) -> (i32, i32) {
    %c0_i32 = arith.constant 0 : i32
    %c0_i32_0 = arith.constant 0 : i32
    return %arg0, %c0_i32 : i32, i32
  }
  func.func @transform_5(%arg0: i32, %arg1: i32) -> (i32, i32) {
    %c0_i32 = arith.constant 0 : i32
    %c0_i32_0 = arith.constant 0 : i32
    return %c0_i32, %arg1 : i32, i32
  }
  func.func @transform_6(%arg0: i32, %arg1: i32) -> (i32, i32, i32) {
    %c0_i32 = arith.constant 0 : i32
    %c0_i32_0 = arith.constant 0 : i32
    %c0_i32_1 = arith.constant 0 : i32
    return %arg0, %c0_i32, %c0_i32_0 : i32, i32, i32
  }
  func.func @transform_7(%arg0: i32, %arg1: i32) -> (i32, i32, i32) {
    %c0_i32 = arith.constant 0 : i32
    %c0_i32_0 = arith.constant 0 : i32
    %c0_i32_1 = arith.constant 0 : i32
    return %arg0, %c0_i32, %c0_i32_0 : i32, i32, i32
  }
}

</mosaic_0001>

<llo_original>
// kernel: improved_contrastive_loss.1
$region0: #{improved_contrastive_loss.1}
  #allocation0 [shape = 'u32[]', space=smem, size = 0x4, offset = 0x4, fixed_abs, tag = 'smem constant byte address 0x4 - core index']
  #allocation1 [shape = 'u32[144,128]{1,0:T(1,128)}', space=vmem, size = 0x12000, scoped, tag = 'internal scratch']
  #allocation2 [shape = 'f32[2]{0:T(128)}', space=smem, size = 0x200, scoped, tag = 'scratch operand']
  #allocation3 [shape = 's32[1]{0:T(128)}', space=smem, size = 0x200, scoped, tag = 'scratch operand']
  %s0 = inlined_call_operand.vmem [shape: f32[8,128], index: 0, kind: input, shape index: {}]
  %s1 = inlined_call_operand.vmem [shape: f32[128,8], index: 1, kind: input, shape index: {}]
  %s2 = inlined_call_operand.vmem [shape: f32[8,1], index: 2, kind: input, shape index: {}]
  %s3 = inlined_call_operand.vmem [shape: f32[1,8], index: 3, kind: input, shape index: {}]
  %s4 = inlined_call_operand.vmem [shape: s32[8,1], index: 4, kind: input, shape index: {}]
  %s5 = inlined_call_operand.vmem [shape: s32[1,8], index: 5, kind: input, shape index: {}]
  %s6 = inlined_call_operand.vmem [shape: f32[1,8,128], index: 6, kind: output, shape index: {0}]
  %s7 = inlined_call_operand.vmem [shape: s32[1,8,128], index: 7, kind: output, shape index: {1}]
  %8 = xla_tuple %s6, %s7
  %s9 = sld [smem:[#allocation0]]
  $region58: #{improved_contrastive_loss.1} parent=0
    _
  %s11 = ssub.s32 1, %s9
  %s12 = scalar_select 0, %s11, %s9
  // Predicated region
  $region2: #{improved_contrastive_loss.1} parent=0 // pred_check
    _
  $region3: #{improved_contrastive_loss.1} parent=0 // pred_check_branch
    %14 = sbr.rel (0) target = $region5
  $region4: #{improved_contrastive_loss.1} parent=0 // pred_region
    _
  $region5: #{improved_contrastive_loss.1} parent=0 // pred_fallthru
    _
  // Predicated region
  $region6: #{improved_contrastive_loss.1} parent=0 // pred_check
    _
  $region7: #{improved_contrastive_loss.1} parent=0 // pred_check_branch
    %16 = sbr.rel (0) target = $region9
  $region8: #{improved_contrastive_loss.1} parent=0 // pred_region
    _
  $region9: #{improved_contrastive_loss.1} parent=0 // pred_fallthru
    _
  // Predicated region
  $region10: #{improved_contrastive_loss.1} parent=0 // pred_check
    _
  $region11: #{improved_contrastive_loss.1} parent=0 // pred_check_branch
    %18 = sbr.rel (0) target = $region13
  $region12: #{improved_contrastive_loss.1} parent=0 // pred_region
    _
  $region13: #{improved_contrastive_loss.1} parent=0 // pred_fallthru
    _
  // Predicated region
  $region14: #{improved_contrastive_loss.1} parent=0 // pred_check
    _
  $region15: #{improved_contrastive_loss.1} parent=0 // pred_check_branch
    %20 = sbr.rel (0) target = $region17
  $region16: #{improved_contrastive_loss.1} parent=0 // pred_region
    _
  $region17: #{improved_contrastive_loss.1} parent=0 // pred_fallthru
    _
  // Predicated region
  $region18: #{improved_contrastive_loss.1} parent=0 // pred_check
    _
  $region19: #{improved_contrastive_loss.1} parent=0 // pred_check_branch
    %22 = sbr.rel (0) target = $region21
  $region20: #{improved_contrastive_loss.1} parent=0 // pred_region
    _
  $region21: #{improved_contrastive_loss.1} parent=0 // pred_fallthru
    _
  // Predicated region
  $region22: #{improved_contrastive_loss.1} parent=0 // pred_check
    _
  $region23: #{improved_contrastive_loss.1} parent=0 // pred_check_branch
    %24 = sbr.rel (0) target = $region25
  $region24: #{improved_contrastive_loss.1} parent=0 // pred_region
    _
  $region25: #{improved_contrastive_loss.1} parent=0 // pred_fallthru
    _
  %p25 = scmp.eq.s32.totalorder 0, 0
  // Predicated region
  $region26: #{improved_contrastive_loss.1} parent=0 // pred_check
    %p26 = pneg %p25
  $region27: #{improved_contrastive_loss.1} parent=0 // pred_check_branch
    %28 = sbr.rel (%p26) target = $region29
  $region28: #{improved_contrastive_loss.1} parent=0 // pred_region
    %s29 = scalar_lea.smem [#allocation2], 0
    %30 = sst [smem:[%s29]] 0.0
    %s31 = scalar_lea.smem [#allocation2], 1
    %32 = sst [smem:[%s31]] 0.0
    %s33 = scalar_lea.smem [#allocation3], 0
    %34 = sst [smem:[%s33]] 0
  $region29: #{improved_contrastive_loss.1} parent=0 // pred_fallthru
    _
  %v35 = vld [vmem:[%s0] sm:$0xff]
  %v36 = vld [vmem:[%s1] sm:$0xff]
  %v37 = vld [vmem:[%s1 + $0x8] sm:$0xff]
  %v38 = vld [vmem:[%s1 + $0x10] sm:$0xff]
  %v39 = vld [vmem:[%s1 + $0x18] sm:$0xff]
  %v40 = vld [vmem:[%s1 + $0x20] sm:$0xff]
  %v41 = vld [vmem:[%s1 + $0x28] sm:$0xff]
  %v42 = vld [vmem:[%s1 + $0x30] sm:$0xff]
  %v43 = vld [vmem:[%s1 + $0x38] sm:$0xff]
  %v44 = vld [vmem:[%s1 + $0x40] sm:$0xff]
  %v45 = vld [vmem:[%s1 + $0x48] sm:$0xff]
  %v46 = vld [vmem:[%s1 + $0x50] sm:$0xff]
  %v47 = vld [vmem:[%s1 + $0x58] sm:$0xff]
  %v48 = vld [vmem:[%s1 + $0x60] sm:$0xff]
  %v49 = vld [vmem:[%s1 + $0x68] sm:$0xff]
  %v50 = vld [vmem:[%s1 + $0x70] sm:$0xff]
  %v51 = vld [vmem:[%s1 + $0x78] sm:$0xff]
  %52 = vmatprep.subr.mxu0 0.0
  %53 = vmatpush1.msra.mxu0 %v36
  %54 = vmatprep.subr.mxu0 0.0
  %55 = vmatpush1.msra.mxu0 %v37
  %56 = vmatprep.subr.mxu0 0.0
  %57 = vmatpush1.msra.mxu0 %v38
  %58 = vmatprep.subr.mxu0 0.0
  %59 = vmatpush1.msra.mxu0 %v39
  %60 = vmatprep.subr.mxu0 0.0
  %61 = vmatpush1.msra.mxu0 %v40
  %62 = vmatprep.subr.mxu0 0.0
  %63 = vmatpush1.msra.mxu0 %v41
  %64 = vmatprep.subr.mxu0 0.0
  %65 = vmatpush1.msra.mxu0 %v42
  %66 = vmatprep.subr.mxu0 0.0
  %67 = vmatpush1.msra.mxu0 %v43
  %68 = vmatprep.subr.mxu0 0.0
  %69 = vmatpush1.msra.mxu0 %v44
  %70 = vmatprep.subr.mxu0 0.0
  %71 = vmatpush1.msra.mxu0 %v45
  %72 = vmatprep.subr.mxu0 0.0
  %73 = vmatpush1.msra.mxu0 %v46
  %74 = vmatprep.subr.mxu0 0.0
  %75 = vmatpush1.msra.mxu0 %v47
  %76 = vmatprep.subr.mxu0 0.0
  %77 = vmatpush1.msra.mxu0 %v48
  %78 = vmatprep.subr.mxu0 0.0
  %79 = vmatpush1.msra.mxu0 %v49
  %80 = vmatprep.subr.mxu0 0.0
  %81 = vmatpush1.msra.mxu0 %v50
  %82 = vmatprep.subr.mxu0 0.0
  %83 = vmatpush1.msra.mxu0 %v51
  %84 = vmatprep.subr.mxu0 0.0
  %85 = vmatpush1.msra.mxu0 0.0
  %86 = vmatprep.subr.mxu0 0.0
  %87 = vmatpush1.msra.mxu0 0.0
  %88 = vmatprep.subr.mxu0 0.0
  %89 = vmatpush1.msra.mxu0 0.0
  %90 = vmatprep.subr.mxu0 0.0
  %91 = vmatpush1.msra.mxu0 0.0
  %92 = vmatprep.subr.mxu0 0.0
  %93 = vmatpush1.msra.mxu0 0.0
  %94 = vmatprep.subr.mxu0 0.0
  %95 = vmatpush1.msra.mxu0 0.0
  %96 = vmatprep.subr.mxu0 0.0
  %97 = vmatpush1.msra.mxu0 0.0
  %98 = vmatprep.subr.mxu0 0.0
  %99 = vmatpush1.msra.mxu0 0.0
  %100 = vmatprep.subr.mxu0 0.0
  %101 = vmatpush1.msra.mxu0 0.0
  %102 = vmatprep.subr.mxu0 0.0
  %103 = vmatpush1.msra.mxu0 0.0
  %104 = vmatprep.subr.mxu0 0.0
  %105 = vmatpush1.msra.mxu0 0.0
  %106 = vmatprep.subr.mxu0 0.0
  %107 = vmatpush1.msra.mxu0 0.0
  %108 = vmatprep.subr.mxu0 0.0
  %109 = vmatpush1.msra.mxu0 0.0
  %110 = vmatprep.subr.mxu0 0.0
  %111 = vmatpush1.msra.mxu0 0.0
  %112 = vmatprep.subr.mxu0 0.0
  %113 = vmatpush1.msra.mxu0 0.0
  %114 = vmatprep.subr.mxu0 0.0
  %115 = vmatpush1.msra.mxu0 0.0
  %116 = vmatprep.mubr.f32.mxu0 0.0
  %117 = vmatmul.mubr.f32.gmra.mrb[0].mxu0 %v35
  %v118 = vpop.f32.mrb[0].mxu0
  %v119 = vadd.f32 0.0, %v118
  %v120 = vpop.f32.mrb[0].mxu0
  %121 = vdwg.mxu0
  %v122 = vld [vmem:[%s2] sm:$0xff]
  %v123 = vld [vmem:[%s3] sm:$0x1]
  %125 = vset.pattern.permute.xlu0 0
  %126 = vperm.xlu0 %125, %v122
  %v127 = vpop.permute.xlu0 %126
  %v130 = vlaneseq
  %v131 = vshrl.u32 %v130, 7
  %v132 = vsub.s32 0, %v131
  %v133 = vrot.slane %v123, %v132
  %v135 = vadd.f32 %v127, %v133
  %v136 = vmul.f32 %v119, 2.0
  %v137 = vsub.f32 %v135, %v136
  %v138 = vmax.f32 %v137, 0.0
  %v139 = vrsqrt.pop %v138
  %v140 = vmul.f32 %v138, %v139
  %vm141 = vcmp.eq.f32.partialorder %v138, inf
  %v142 = vsel %vm141, %v138, %v140
  %vm143 = vcmp.eq.f32.partialorder %v138, 0.0
  %v144 = vand.u32 %v138, 2147483648
  %v145 = vsel %vm143, %v144, %v142
  %v146 = vld [vmem:[%s4] sm:$0xff]
  %v147 = vld [vmem:[%s5] sm:$0x1]
  %148 = vset.pattern.permute.xlu0 0
  %149 = vperm.xlu0 %148, %v146
  %v150 = vpop.permute.xlu0 %149
  %v151 = vlaneseq
  %v152 = vshrl.u32 %v151, 7
  %v153 = vsub.s32 0, %v152
  %v154 = vrot.slane %v147, %v153
  %vm155 = vcmp.eq.s32.totalorder %v150, %v154
  %p156 = scmp.eq.s32.totalorder 0, 0
  // Predicated region
  $region30: #{improved_contrastive_loss.1} parent=0 // pred_check
    %p157 = pneg %p156
  $region31: #{improved_contrastive_loss.1} parent=0 // pred_check_branch
    %159 = sbr.rel (%p157) target = $region33
  $region32: #{improved_contrastive_loss.1} parent=0 // pred_region
    %v160 = vlaneseq
    %v161 = vshrl.u32 %v160, 7
    %v162 = vlaneseq
    %v163 = vand.u32 %v162, 127
    %vm164 = vcmp.ne.s32.totalorder %v161, %v163
    %vm165 = vmand %vm155, %vm164
    %v166 = vsel %vm165, %v145, 0.0
    %vm167 = vcmask 64512
    %v168 = vsel %vm167, %v166, 0.0
    %169 = vadd.xlane.f32.xlu0 %v168
    %v170 = vpop.xlane.xlu0 %169
    %v171 = vrot.slane %v170, 4
    %v172 = vadd.f32 %v170, %v171
    %v173 = vrot.slane %v172, 2
    %v174 = vadd.f32 %v172, %v173
    %v175 = vrot.slane %v174, 1
    %v176 = vadd.f32 %v174, %v175
    %s177 = vtos %v176
    %v178 = vsel %vm164, %v145, 0.0
    %v179 = vsel %vm167, %v178, 0.0
    %180 = vadd.xlane.f32.xlu0 %v179
    %v181 = vpop.xlane.xlu0 %180
    %v182 = vrot.slane %v181, 4
    %v183 = vadd.f32 %v181, %v182
    %v184 = vrot.slane %v183, 2
    %v185 = vadd.f32 %v183, %v184
    %v186 = vrot.slane %v185, 1
    %v187 = vadd.f32 %v185, %v186
    %s188 = vtos %v187
    %v189 = vsel %vm165, 1.0, 0.0
    %v190 = vsel %vm167, %v189, 0.0
    %191 = vadd.xlane.f32.xlu0 %v190
    %v192 = vpop.xlane.xlu0 %191
    %v193 = vrot.slane %v192, 4
    %v194 = vadd.f32 %v192, %v193
    %v195 = vrot.slane %v194, 2
    %v196 = vadd.f32 %v194, %v195
    %v197 = vrot.slane %v196, 1
    %v198 = vadd.f32 %v196, %v197
    %s199 = vtos %v198
    %s200 = sld [smem:[#allocation2]]
    %s201 = sadd.f32 %s200, %s177
    %s202 = scalar_lea.smem [#allocation2], 0
    %203 = sst [smem:[%s202]] %s201
    %s204 = sld [smem:[#allocation2 + $0x1]]
    %s205 = sadd.f32 %s204, %s188
    %s206 = scalar_lea.smem [#allocation2], 1
    %207 = sst [smem:[%s206]] %s205
    %s208 = sld [smem:[#allocation3]]
    %s209 = scvt.f32.s32.to.zero.pseudo %s199
    %s210 = sadd.s32 %s208, %s209
    %s211 = scalar_lea.smem [#allocation3], 0
    %212 = sst [smem:[%s211]] %s210
  $region33: #{improved_contrastive_loss.1} parent=0 // pred_fallthru
    _
  %p213 = scmp.ne.s32.totalorder 0, 0
  // Predicated region
  $region34: #{improved_contrastive_loss.1} parent=0 // pred_check
    %p214 = pneg %p213
  $region35: #{improved_contrastive_loss.1} parent=0 // pred_check_branch
    %216 = sbr.rel (%p214) target = $region37
  $region36: #{improved_contrastive_loss.1} parent=0 // pred_region
    %v217 = vsel %vm155, %v145, 0.0
    %vm218 = vcmask 64512
    %v219 = vsel %vm218, %v217, 0.0
    %220 = vadd.xlane.f32.xlu0 %v219
    %v221 = vpop.xlane.xlu0 %220
    %v222 = vrot.slane %v221, 4
    %v223 = vadd.f32 %v221, %v222
    %v224 = vrot.slane %v223, 2
    %v225 = vadd.f32 %v223, %v224
    %v226 = vrot.slane %v225, 1
    %v227 = vadd.f32 %v225, %v226
    %s228 = vtos %v227
    %v229 = vsel %vm218, %v145, 0.0
    %230 = vadd.xlane.f32.xlu0 %v229
    %v231 = vpop.xlane.xlu0 %230
    %v232 = vrot.slane %v231, 4
    %v233 = vadd.f32 %v231, %v232
    %v234 = vrot.slane %v233, 2
    %v235 = vadd.f32 %v233, %v234
    %v236 = vrot.slane %v235, 1
    %v237 = vadd.f32 %v235, %v236
    %s238 = vtos %v237
    %v239 = vsel %vm155, 1.0, 0.0
    %v240 = vsel %vm218, %v239, 0.0
    %241 = vadd.xlane.f32.xlu0 %v240
    %v242 = vpop.xlane.xlu0 %241
    %v243 = vrot.slane %v242, 4
    %v244 = vadd.f32 %v242, %v243
    %v245 = vrot.slane %v244, 2
    %v246 = vadd.f32 %v244, %v245
    %v247 = vrot.slane %v246, 1
    %v248 = vadd.f32 %v246, %v247
    %s249 = vtos %v248
    %s250 = sld [smem:[#allocation2]]
    %s251 = sadd.f32 %s250, %s228
    %s252 = scalar_lea.smem [#allocation2], 0
    %253 = sst [smem:[%s252]] %s251
    %s254 = sld [smem:[#allocation2 + $0x1]]
    %s255 = sadd.f32 %s254, %s238
    %s256 = scalar_lea.smem [#allocation2], 1
    %257 = sst [smem:[%s256]] %s255
    %s258 = sld [smem:[#allocation3]]
    %s259 = scvt.f32.s32.to.zero.pseudo %s249
    %s260 = sadd.s32 %s258, %s259
    %s261 = scalar_lea.smem [#allocation3], 0
    %262 = sst [smem:[%s261]] %s260
  $region37: #{improved_contrastive_loss.1} parent=0 // pred_fallthru
    _
  // Predicated region
  $region38: #{improved_contrastive_loss.1} parent=0 // pred_check
    %p263 = pneg %p25
  $region39: #{improved_contrastive_loss.1} parent=0 // pred_check_branch
    %265 = sbr.rel (%p263) target = $region41
  $region40: #{improved_contrastive_loss.1} parent=0 // pred_region
    %v266 = vlaneseq
    %v267 = vshrl.u32 %v266, 7
    %v268 = vlaneseq
    %v269 = vand.u32 %v268, 127
    %vm270 = vcmp.eq.s32.totalorder %v267, 0
    %vm271 = vcmp.eq.s32.totalorder %v269, 0
    %vm272 = vmand %vm270, %vm271
    %vm273 = vcmp.eq.s32.totalorder %v267, 1
    %vm274 = vmand %vm273, %vm271
    %s275 = sld [smem:[#allocation2]]
    %v276 = vstv %s275
    %v277 = vsel %vm272, %v276, 0.0
    %s278 = sld [smem:[#allocation2 + $0x1]]
    %v279 = vstv %s278
    %v280 = vsel %vm274, %v279, 0.0
    %v281 = vadd.f32 %v277, %v280
    %282 = vst [vmem:[%s6] sm:$0xff] %v281
    %s283 = sld [smem:[#allocation3]]
    %v284 = vstv %s283
    %v285 = vsel %vm272, %v284, 0
    %286 = vst [vmem:[%s7] sm:$0xff] %v285
  $region41: #{improved_contrastive_loss.1} parent=0 // pred_fallthru
    _
  // Predicated region
  $region42: #{improved_contrastive_loss.1} parent=0 // pred_check
    _
  $region43: #{improved_contrastive_loss.1} parent=0 // pred_check_branch
    %288 = sbr.rel (0) target = $region45
  $region44: #{improved_contrastive_loss.1} parent=0 // pred_region
    _
  $region45: #{improved_contrastive_loss.1} parent=0 // pred_fallthru
    _
  // Predicated region
  $region46: #{improved_contrastive_loss.1} parent=0 // pred_check
    _
  $region47: #{improved_contrastive_loss.1} parent=0 // pred_check_branch
    %290 = sbr.rel (0) target = $region49
  $region48: #{improved_contrastive_loss.1} parent=0 // pred_region
    _
  $region49: #{improved_contrastive_loss.1} parent=0 // pred_fallthru
    _
  // Predicated region
  $region50: #{improved_contrastive_loss.1} parent=0 // pred_check
    _
  $region51: #{improved_contrastive_loss.1} parent=0 // pred_check_branch
    %292 = sbr.rel (0) target = $region53
  $region52: #{improved_contrastive_loss.1} parent=0 // pred_region
    _
  $region53: #{improved_contrastive_loss.1} parent=0 // pred_fallthru
    _
  // Predicated region
  $region54: #{improved_contrastive_loss.1} parent=0 // pred_check
    _
  $region55: #{improved_contrastive_loss.1} parent=0 // pred_check_branch
    %294 = sbr.rel (0) target = $region57
  $region56: #{improved_contrastive_loss.1} parent=0 // pred_region
    _
  $region57: #{improved_contrastive_loss.1} parent=0 // pred_fallthru
    _

</llo_original>
